<compile_context>
chip_gen: v5e
topology: v5e:2x2
jax: 0.10.0
libtpu: 0.0.40
codegen_flags: <defaults>
</compile_context>

<pallas_src>
import functools

import jax
import jax.numpy as jnp
from jax.experimental import pallas as pl
from jax.experimental.pallas import tpu as pltpu


def _round_up(x, m):
    return ((x + m - 1) // m) * m


def _refnet_kernel(x_ref,
                   wf_ref, bf_ref,      # fused first layer  (D, H+SP), (1, H+SP)
                   w2_ref, b2_ref,      # dnn second layer   (H, D),    (1, D)
                   sw2_ref, sb2_ref,    # scale output layer (1, SP),   (1, 1)
                   out_ref, *, H):
    x = x_ref[...]                                   # (tm, D) f32
    x_bf = x.astype(jnp.bfloat16)

    # Fused first layer: [dnn.Linear1 | scale_net.Linear1] in one MXU pass.
    y = jnp.dot(x_bf, wf_ref[...], preferred_element_type=jnp.float32)
    y = y + bf_ref[...]                              # (tm, H+SP) f32

    # dnn branch: Tanh -> Linear(H, D)
    h = jnp.tanh(y[:, :H])                           # (tm, H) f32
    dnn_out = jnp.dot(h.astype(jnp.bfloat16), w2_ref[...],
                      preferred_element_type=jnp.float32) + b2_ref[...]

    # scale branch: Tanh -> Linear(Hs, 1) as VPU mul + lane reduce -> Sigmoid.
    # Padded lanes of y are exactly zero (zero-padded sw1/sb1), and sw2 is
    # zero-padded too, so they contribute nothing to the reduction.
    s = jnp.tanh(y[:, H:])                           # (tm, SP) f32
    theta = jnp.sum(s * sw2_ref[...], axis=-1, keepdims=True) + sb2_ref[...]
    theta = jax.nn.sigmoid(theta)                    # (tm, 1) f32

    out_ref[...] = (theta * dnn_out).astype(out_ref.dtype)


def refnet_forward(x, params, *, tm=1024):
    """x: (N, D) float32.  params: weights stored as (in, out), biases (1, out)."""
    N, D = x.shape
    w1, b1 = params["w1"], params["b1"]
    w2, b2 = params["w2"], params["b2"]
    sw1, sb1 = params["sw1"], params["sb1"]
    sw2, sb2 = params["sw2"], params["sb2"]
    H = w1.shape[1]
    Hs = sw1.shape[1]
    SP = _round_up(Hs, 128)          # pad scale hidden to a full 128-lane group

    # ---- pack parameters (tiny, wrapper-side) ----
    wf = jnp.concatenate(
        [w1, jnp.pad(sw1, ((0, 0), (0, SP - Hs)))], axis=1).astype(jnp.bfloat16)
    bf = jnp.concatenate(
        [b1, jnp.pad(sb1, ((0, 0), (0, SP - Hs)))], axis=1).astype(jnp.float32)
    w2_bf = w2.astype(jnp.bfloat16)
    b2_f = b2.astype(jnp.float32)
    sw2_row = jnp.pad(sw2.reshape(1, Hs),
                      ((0, 0), (0, SP - Hs))).astype(jnp.float32)
    sb2_sc = sb2.reshape(1, 1).astype(jnp.float32)

    # ---- row tiling: big tiles, ragged N via cdiv + padding ----
    tm = _round_up(max(8, min(tm, _round_up(N, 256))), 8)
    n_tiles = pl.cdiv(N, tm)
    n_pad = n_tiles * tm
    x_p = x if n_pad == N else jnp.pad(x, ((0, n_pad - N), (0, 0)))

    full = lambda shape: pl.BlockSpec(shape, lambda i: (0,) * len(shape))
    kernel = functools.partial(_refnet_kernel, H=H)

    out = pl.pallas_call(
        kernel,
        out_shape=jax.ShapeDtypeStruct((n_pad, D), x.dtype),
        grid_spec=pltpu.PrefetchScalarGridSpec(
            num_scalar_prefetch=0,
            grid=(n_tiles,),
            in_specs=[
                pl.BlockSpec((tm, D), lambda i: (i, 0)),   # X row tile
                full((D, H + SP)), full((1, H + SP)),      # fused first layer
                full((H, D)), full((1, D)),                # dnn Linear 2
                full((1, SP)), full((1, 1)),               # scale Linear 2
            ],
            out_specs=pl.BlockSpec((tm, D), lambda i: (i, 0)),
        ),
        compiler_params=pltpu.CompilerParams(
            dimension_semantics=("parallel",),
            vmem_limit_bytes=48 * 1024 * 1024,   # headroom for larger tm sweeps
        ),
    )(x_p, wf, bf, w2_bf, b2_f, sw2_row, sb2_sc)

    return out[:N] if n_pad != N else out


def refnet_reference(x, p):
    h = jnp.tanh(x @ p["w1"] + p["b1"])
    dnn_out = h @ p["w2"] + p["b2"]
    s = jnp.tanh(x @ p["sw1"] + p["sb1"])
    theta = jax.nn.sigmoid(s @ p["sw2"] + p["sb2"])
    return theta * dnn_out


def make_params(key, D, H, Hs):
    ks = jax.random.split(key, 8)

    def lin(kw, kb, fan_in, fan_out):
        bound = 1.0 / jnp.sqrt(fan_in)
        w = jax.random.uniform(kw, (fan_in, fan_out), jnp.float32, -bound, bound)
        b = jax.random.uniform(kb, (1, fan_out), jnp.float32, -bound, bound)
        return w, b

    w1, b1 = lin(ks[0], ks[1], D, H)
    w2, b2 = lin(ks[2], ks[3], H, D)
    sw1, sb1 = lin(ks[4], ks[5], D, Hs)
    sw2, sb2 = lin(ks[6], ks[7], Hs, 1)
    return dict(w1=w1, b1=b1, w2=w2, b2=b2, sw1=sw1, sb1=sb1, sw2=sw2, sb2=sb2)


if __name__ == "__main__":
    # Small shapes consistent with xGCN RefNet: node-embedding dim D, hidden H.
    D, H, Hs = 64, 256, 32

    key = jax.random.PRNGKey(0)
    kx, kp, kx2 = jax.random.split(key, 3)
    params = make_params(kp, D, H, Hs)

    # Case 1: small, tile-aligned batch (multi-step grid with tm=128).
    x = jax.random.normal(kx, (256, D), jnp.float32)
    out = jax.block_until_ready(refnet_forward(x, params, tm=128))
    ref = refnet_reference(x, params)
    assert out.shape == x.shape
    assert jnp.allclose(out, ref, atol=2e-2, rtol=2e-2), "mismatch (aligned case)"

    # Case 2: ragged N exercising cdiv + padding + large row tile.
    x2 = jax.random.normal(kx2, (2000, D), jnp.float32)
    out2 = jax.block_until_ready(refnet_forward(x2, params, tm=1024))
    ref2 = refnet_reference(x2, params)
    assert out2.shape == x2.shape
    assert jnp.allclose(out2, ref2, atol=2e-2, rtol=2e-2), "mismatch (ragged case)"

    print("KERNEL_OK")
</pallas_src>

<mosaic_0001>
module attributes {stable_mosaic.version = 11 : i64} {
  func.func @_refnet_kernel(%arg0: i32, %arg1: memref<128x64xf32, #tpu.memory_space<vmem>>, %arg2: memref<64x384xbf16, #tpu.memory_space<vmem>>, %arg3: memref<1x384xf32, #tpu.memory_space<vmem>>, %arg4: memref<256x64xbf16, #tpu.memory_space<vmem>>, %arg5: memref<1x64xf32, #tpu.memory_space<vmem>>, %arg6: memref<1x128xf32, #tpu.memory_space<vmem>>, %arg7: memref<1x1xf32, #tpu.memory_space<vmem>>, %arg8: memref<128x64xf32, #tpu.memory_space<vmem>>) attributes {dimension_semantics = [#tpu.dimension_semantics<parallel>], iteration_bounds = array<i64: 2>, scalar_prefetch = 0 : i64, scratch_operands = 0 : i64, tpu.core_type = #tpu.core_type<tc>, window_params = [{transform_indices = @transform_0, window_bounds = array<i64: 128, 64>}, {pipeline_mode = #tpu.pipeline_mode<synchronous>, transform_indices = @transform_1, window_bounds = array<i64: 64, 384>}, {pipeline_mode = #tpu.pipeline_mode<synchronous>, transform_indices = @transform_2, window_bounds = array<i64: 1, 384>}, {pipeline_mode = #tpu.pipeline_mode<synchronous>, transform_indices = @transform_3, window_bounds = array<i64: 256, 64>}, {pipeline_mode = #tpu.pipeline_mode<synchronous>, transform_indices = @transform_4, window_bounds = array<i64: 1, 64>}, {pipeline_mode = #tpu.pipeline_mode<synchronous>, transform_indices = @transform_5, window_bounds = array<i64: 1, 128>}, {pipeline_mode = #tpu.pipeline_mode<synchronous>, transform_indices = @transform_6, window_bounds = array<i64: 1, 1>}, {transform_indices = @transform_7, window_bounds = array<i64: 128, 64>}]} {
    %c0 = arith.constant 0 : index
    %c0_0 = arith.constant 0 : index
    %0 = vector.load %arg1[%c0, %c0_0] : memref<128x64xf32, #tpu.memory_space<vmem>>, vector<128x64xf32>
    %1 = arith.truncf %0 : vector<128x64xf32> to vector<128x64xbf16>
    %c0_1 = arith.constant 0 : index
    %c0_2 = arith.constant 0 : index
    %2 = vector.load %arg2[%c0_1, %c0_2] : memref<64x384xbf16, #tpu.memory_space<vmem>>, vector<64x384xbf16>
    %cst = arith.constant dense<0.000000e+00> : vector<128x384xf32>
    %3 = tpu.matmul %1, %2, %cst {dimension_numbers = #tpu.dot_dimension_numbers<[1], [0], [0], [1], [0, 0, 1, 1], [], []>} : vector<128x64xbf16>, vector<64x384xbf16>, vector<128x384xf32> -> vector<128x384xf32>
    %c0_3 = arith.constant 0 : index
    %c0_4 = arith.constant 0 : index
    %4 = vector.load %arg3[%c0_3, %c0_4] : memref<1x384xf32, #tpu.memory_space<vmem>>, vector<1x384xf32>
    %5 = vector.broadcast %4 : vector<1x384xf32> to vector<128x384xf32>
    %6 = arith.addf %3, %5 : vector<128x384xf32>
    %7 = vector.extract_strided_slice %6 {offsets = [0, 0], sizes = [128, 256], strides = [1, 1]} : vector<128x384xf32> to vector<128x256xf32>
    %8 = math.tanh %7 : vector<128x256xf32>
    %9 = arith.truncf %8 : vector<128x256xf32> to vector<128x256xbf16>
    %c0_5 = arith.constant 0 : index
    %c0_6 = arith.constant 0 : index
    %10 = vector.load %arg4[%c0_5, %c0_6] : memref<256x64xbf16, #tpu.memory_space<vmem>>, vector<256x64xbf16>
    %cst_7 = arith.constant dense<0.000000e+00> : vector<128x64xf32>
    %11 = tpu.matmul %9, %10, %cst_7 {dimension_numbers = #tpu.dot_dimension_numbers<[1], [0], [0], [1], [0, 0, 1, 1], [], []>} : vector<128x256xbf16>, vector<256x64xbf16>, vector<128x64xf32> -> vector<128x64xf32>
    %c0_8 = arith.constant 0 : index
    %c0_9 = arith.constant 0 : index
    %12 = vector.load %arg5[%c0_8, %c0_9] : memref<1x64xf32, #tpu.memory_space<vmem>>, vector<1x64xf32>
    %13 = vector.broadcast %12 : vector<1x64xf32> to vector<128x64xf32>
    %14 = arith.addf %11, %13 : vector<128x64xf32>
    %15 = vector.extract_strided_slice %6 {offsets = [0, 256], sizes = [128, 128], strides = [1, 1]} : vector<128x384xf32> to vector<128x128xf32>
    %16 = math.tanh %15 : vector<128x128xf32>
    %c0_10 = arith.constant 0 : index
    %c0_11 = arith.constant 0 : index
    %17 = vector.load %arg6[%c0_10, %c0_11] : memref<1x128xf32, #tpu.memory_space<vmem>>, vector<1x128xf32>
    %18 = vector.broadcast %17 : vector<1x128xf32> to vector<128x128xf32>
    %19 = arith.mulf %16, %18 : vector<128x128xf32>
    %cst_12 = arith.constant dense<0.000000e+00> : vector<128xf32>
    %20 = vector.multi_reduction <add>, %19, %cst_12 [1] : vector<128x128xf32> to vector<128xf32>
    %21 = vector.shape_cast %20 : vector<128xf32> to vector<128x1xf32>
    %c0_13 = arith.constant 0 : index
    %c0_14 = arith.constant 0 : index
    %22 = vector.load %arg7[%c0_13, %c0_14] : memref<1x1xf32, #tpu.memory_space<vmem>>, vector<1x1xf32>
    %23 = vector.broadcast %22 : vector<1x1xf32> to vector<128x1xf32>
    %24 = arith.addf %21, %23 : vector<128x1xf32>
    %25 = arith.negf %24 : vector<128x1xf32>
    %26 = math.exp %25 : vector<128x1xf32>
    %cst_15 = arith.constant 1.000000e+00 : f32
    %27 = vector.broadcast %cst_15 : f32 to vector<128x1xf32>
    %28 = arith.addf %27, %26 : vector<128x1xf32>
    %29 = arith.divf %27, %28 : vector<128x1xf32>
    %30 = vector.broadcast %29 : vector<128x1xf32> to vector<128x64xf32>
    %31 = arith.mulf %30, %14 : vector<128x64xf32>
    %c0_16 = arith.constant 0 : index
    %c0_17 = arith.constant 0 : index
    %32 = vector.load %arg8[%c0_16, %c0_17] : memref<128x64xf32, #tpu.memory_space<vmem>>, vector<128x64xf32>
    tpu.vector_store %arg8[%c0_16, %c0_17], %31 {strides = array<i32>} : memref<128x64xf32, #tpu.memory_space<vmem>>, vector<128x64xf32>,
    return
  }
  func.func @transform_0(%arg0: i32) -> (i32, i32) {
    %c0_i32 = arith.constant 0 : i32
    %c0_i32_0 = arith.constant 0 : i32
    return %arg0, %c0_i32 : i32, i32
  }
  func.func @transform_1(%arg0: i32) -> (i32, i32) {
    %c0_i32 = arith.constant 0 : i32
    %c0_i32_0 = arith.constant 0 : i32
    %c0_i32_1 = arith.constant 0 : i32
    return %c0_i32, %c0_i32_0 : i32, i32
  }
  func.func @transform_2(%arg0: i32) -> (i32, i32) {
    %c0_i32 = arith.constant 0 : i32
    %c0_i32_0 = arith.constant 0 : i32
    %c0_i32_1 = arith.constant 0 : i32
    return %c0_i32, %c0_i32_0 : i32, i32
  }
  func.func @transform_3(%arg0: i32) -> (i32, i32) {
    %c0_i32 = arith.constant 0 : i32
    %c0_i32_0 = arith.constant 0 : i32
    %c0_i32_1 = arith.constant 0 : i32
    return %c0_i32, %c0_i32_0 : i32, i32
  }
  func.func @transform_4(%arg0: i32) -> (i32, i32) {
    %c0_i32 = arith.constant 0 : i32
    %c0_i32_0 = arith.constant 0 : i32
    %c0_i32_1 = arith.constant 0 : i32
    return %c0_i32, %c0_i32_0 : i32, i32
  }
  func.func @transform_5(%arg0: i32) -> (i32, i32) {
    %c0_i32 = arith.constant 0 : i32
    %c0_i32_0 = arith.constant 0 : i32
    %c0_i32_1 = arith.constant 0 : i32
    return %c0_i32, %c0_i32_0 : i32, i32
  }
  func.func @transform_6(%arg0: i32) -> (i32, i32) {
    %c0_i32 = arith.constant 0 : i32
    %c0_i32_0 = arith.constant 0 : i32
    %c0_i32_1 = arith.constant 0 : i32
    return %c0_i32, %c0_i32_0 : i32, i32
  }
  func.func @transform_7(%arg0: i32) -> (i32, i32) {
    %c0_i32 = arith.constant 0 : i32
    %c0_i32_0 = arith.constant 0 : i32
    return %arg0, %c0_i32 : i32, i32
  }
}

</mosaic_0001>

<llo_original>
// kernel: tpu_custom_call.1
$region0: #{tpu_custom_call.1}
  #allocation0 [shape = 'u32[]', space=smem, size = 0x4, offset = 0x4, fixed_abs, tag = 'smem constant byte address 0x4 - core index']
  #allocation1 [shape = 'u32[72,128]{1,0:T(1,128)}', space=vmem, size = 0x9000, scoped, tag = 'internal scratch']
  #allocation2 [shape = 'f32[1,1]{1,0:T(1,128)S(1)}', space=vmem, size = 0x200, scoped, tag = 'scoped memory for tpu_custom_call.1']
  %s0 = inlined_call_operand.vmem [shape: f32[256,64], index: 0, kind: input, shape index: {}]
  %s1 = inlined_call_operand.vmem [shape: bf16[64,384], index: 1, kind: input, shape index: {}]
  %s2 = inlined_call_operand.vmem [shape: f32[1,384], index: 2, kind: input, shape index: {}]
  %s3 = inlined_call_operand.vmem [shape: bf16[256,64], index: 3, kind: input, shape index: {}]
  %s4 = inlined_call_operand.vmem [shape: f32[1,64], index: 4, kind: input, shape index: {}]
  %s5 = inlined_call_operand.vmem [shape: f32[1,128], index: 5, kind: input, shape index: {}]
  %s6 = inlined_call_operand.<no memory space> [shape: f32[1,1], index: 6, kind: input, shape index: {}]
  %s7 = inlined_call_operand.vmem [shape: f32[256,64], index: 7, kind: output, shape index: {}]
  %s8 = sld [smem:[#allocation0]]
  $region61: #{tpu_custom_call.1} parent=0
    _
  %s10 = ssub.s32 1, %s8
  %s11 = scalar_select 0, %s10, %s8
  %v12 = vstv %s6
  %13 = vst [vmem:[#allocation2] sm:$0x1] %v12
  loop: start=0, step=1, limit=4
  $region2: #{tpu_custom_call.1} parent=0 // loop_pre_header
    _
  $region3: #{tpu_custom_call.1} parent=0 // loop_header
    %s15 = sphi 0, %s19
    %p16 = scmp.ge.s32.totalorder %s15, 4
    %s25 = sphi 0, %s27
    %s28 = sphi 0, %s25
    %s29 = sphi 0, %s28
    %s45 = sphi 0, %s29
    %s49 = sphi 0, %s49
    %s51 = sphi 0, %s49
    %s52 = sphi 0, %s51
    %s66 = sphi 0, %s52
    %s70 = sphi 0, %s70
    %s72 = sphi 0, %s70
    %s73 = sphi 0, %s72
    %s87 = sphi 0, %s73
    %s91 = sphi 0, %s91
    %s93 = sphi 0, %s91
    %s94 = sphi 0, %s93
    %s108 = sphi 0, %s94
    %s112 = sphi 0, %s112
    %s114 = sphi 0, %s112
    %s115 = sphi 0, %s114
    %s129 = sphi 0, %s115
    %s133 = sphi 0, %s133
    %s135 = sphi 0, %s133
    %s136 = sphi 0, %s135
    %s150 = sphi 0, %s136
    %s154 = sphi 0, %s154
    %s156 = sphi 0, %s154
    %s157 = sphi 0, %s156
    %s171 = sphi 0, %s157
    %s177 = sphi 0, %s179
    %s180 = sphi 0, %s177
    %s181 = sphi 0, %s180
    %s197 = sphi 0, %s181
  $region4: #{tpu_custom_call.1} parent=0 // loop_header_branch
    %18 = sbr.rel (%p16) target = $region8
  $region5: #{tpu_custom_call.1} parent=0 // loop_body
    %s20 = ssub.s32 %s15, 1
    %s21 = ssub.s32 %s15, 2
    %s22 = sadd.s32 %s15, 1
    %s23 = ssub.s32 %s15, %s22
    %p24 = scmp.eq.s32.totalorder %s23, 0
    %s26 = sadd.s32 %s25, 1
    %s27 = scalar_select %p24, %s25, %s26
    %p30 = pneg %p24
    %p31 = scmp.eq.s32.totalorder %s15, 1
    %p32 = por %p30, %p31
    %p33 = scmp.ne.s32.totalorder %s25, %s28
    %p34 = scmp.eq.s32.totalorder %s15, 0
    %p35 = por %p33, %p34
    %p36 = scmp.ne.s32.totalorder %s25, %s28
    %p37 = scmp.eq.s32.totalorder %s20, 1
    %p38 = por %p36, %p37
    %p39 = scmp.ne.s32.totalorder %s28, %s29
    %p40 = scmp.eq.s32.totalorder %s20, 0
    %p41 = por %p39, %p40
    %p42 = scmp.ne.s32.totalorder %s28, %s29
    %p43 = scmp.eq.s32.totalorder %s21, 1
    %p44 = por %p42, %p43
    %p46 = scmp.ne.s32.totalorder %s29, %s45
    %p47 = scmp.eq.s32.totalorder %s21, 0
    %p48 = por %p46, %p47
    %s50 = sadd.s32 %s49, 1
    %p53 = scmp.eq.s32.totalorder %s15, 1
    %p54 = scmp.ne.s32.totalorder %s49, %s51
    %p55 = scmp.eq.s32.totalorder %s15, 0
    %p56 = por %p54, %p55
    %p57 = scmp.ne.s32.totalorder %s49, %s51
    %p58 = scmp.eq.s32.totalorder %s20, 1
    %p59 = por %p57, %p58
    %p60 = scmp.ne.s32.totalorder %s51, %s52
    %p61 = scmp.eq.s32.totalorder %s20, 0
    %p62 = por %p60, %p61
    %p63 = scmp.ne.s32.totalorder %s51, %s52
    %p64 = scmp.eq.s32.totalorder %s21, 1
    %p65 = por %p63, %p64
    %p67 = scmp.ne.s32.totalorder %s52, %s66
    %p68 = scmp.eq.s32.totalorder %s21, 0
    %p69 = por %p67, %p68
    %s71 = sadd.s32 %s70, 1
    %p74 = scmp.eq.s32.totalorder %s15, 1
    %p75 = scmp.ne.s32.totalorder %s70, %s72
    %p76 = scmp.eq.s32.totalorder %s15, 0
    %p77 = por %p75, %p76
    %p78 = scmp.ne.s32.totalorder %s70, %s72
    %p79 = scmp.eq.s32.totalorder %s20, 1
    %p80 = por %p78, %p79
    %p81 = scmp.ne.s32.totalorder %s72, %s73
    %p82 = scmp.eq.s32.totalorder %s20, 0
    %p83 = por %p81, %p82
    %p84 = scmp.ne.s32.totalorder %s72, %s73
    %p85 = scmp.eq.s32.totalorder %s21, 1
    %p86 = por %p84, %p85
    %p88 = scmp.ne.s32.totalorder %s73, %s87
    %p89 = scmp.eq.s32.totalorder %s21, 0
    %p90 = por %p88, %p89
    %s92 = sadd.s32 %s91, 1
    %p95 = scmp.eq.s32.totalorder %s15, 1
    %p96 = scmp.ne.s32.totalorder %s91, %s93
    %p97 = scmp.eq.s32.totalorder %s15, 0
    %p98 = por %p96, %p97
    %p99 = scmp.ne.s32.totalorder %s91, %s93
    %p100 = scmp.eq.s32.totalorder %s20, 1
    %p101 = por %p99, %p100
    %p102 = scmp.ne.s32.totalorder %s93, %s94
    %p103 = scmp.eq.s32.totalorder %s20, 0
    %p104 = por %p102, %p103
    %p105 = scmp.ne.s32.totalorder %s93, %s94
    %p106 = scmp.eq.s32.totalorder %s21, 1
    %p107 = por %p105, %p106
    %p109 = scmp.ne.s32.totalorder %s94, %s108
    %p110 = scmp.eq.s32.totalorder %s21, 0
    %p111 = por %p109, %p110
    %s113 = sadd.s32 %s112, 1
    %p116 = scmp.eq.s32.totalorder %s15, 1
    %p117 = scmp.ne.s32.totalorder %s112, %s114
    %p118 = scmp.eq.s32.totalorder %s15, 0
    %p119 = por %p117, %p118
    %p120 = scmp.ne.s32.totalorder %s112, %s114
    %p121 = scmp.eq.s32.totalorder %s20, 1
    %p122 = por %p120, %p121
    %p123 = scmp.ne.s32.totalorder %s114, %s115
    %p124 = scmp.eq.s32.totalorder %s20, 0
    %p125 = por %p123, %p124
    %p126 = scmp.ne.s32.totalorder %s114, %s115
    %p127 = scmp.eq.s32.totalorder %s21, 1
    %p128 = por %p126, %p127
    %p130 = scmp.ne.s32.totalorder %s115, %s129
    %p131 = scmp.eq.s32.totalorder %s21, 0
    %p132 = por %p130, %p131
    %s134 = sadd.s32 %s133, 1
    %p137 = scmp.eq.s32.totalorder %s15, 1
    %p138 = scmp.ne.s32.totalorder %s133, %s135
    %p139 = scmp.eq.s32.totalorder %s15, 0
    %p140 = por %p138, %p139
    %p141 = scmp.ne.s32.totalorder %s133, %s135
    %p142 = scmp.eq.s32.totalorder %s20, 1
    %p143 = por %p141, %p142
    %p144 = scmp.ne.s32.totalorder %s135, %s136
    %p145 = scmp.eq.s32.totalorder %s20, 0
    %p146 = por %p144, %p145
    %p147 = scmp.ne.s32.totalorder %s135, %s136
    %p148 = scmp.eq.s32.totalorder %s21, 1
    %p149 = por %p147, %p148
    %p151 = scmp.ne.s32.totalorder %s136, %s150
    %p152 = scmp.eq.s32.totalorder %s21, 0
    %p153 = por %p151, %p152
    %s155 = sadd.s32 %s154, 1
    %p158 = scmp.eq.s32.totalorder %s15, 1
    %p159 = scmp.ne.s32.totalorder %s154, %s156
    %p160 = scmp.eq.s32.totalorder %s15, 0
    %p161 = por %p159, %p160
    %p162 = scmp.ne.s32.totalorder %s154, %s156
    %p163 = scmp.eq.s32.totalorder %s20, 1
    %p164 = por %p162, %p163
    %p165 = scmp.ne.s32.totalorder %s156, %s157
    %p166 = scmp.eq.s32.totalorder %s20, 0
    %p167 = por %p165, %p166
    %p168 = scmp.ne.s32.totalorder %s156, %s157
    %p169 = scmp.eq.s32.totalorder %s21, 1
    %p170 = por %p168, %p169
    %p172 = scmp.ne.s32.totalorder %s157, %s171
    %p173 = scmp.eq.s32.totalorder %s21, 0
    %p174 = por %p172, %p173
    %s175 = ssub.s32 %s15, %s22
    %p176 = scmp.eq.s32.totalorder %s175, 0
    %s178 = sadd.s32 %s177, 1
    %s179 = scalar_select %p176, %s177, %s178
    %p182 = pneg %p176
    %p183 = scmp.eq.s32.totalorder %s15, 1
    %p184 = por %p182, %p183
    %p185 = scmp.ne.s32.totalorder %s177, %s180
    %p186 = scmp.eq.s32.totalorder %s15, 0
    %p187 = por %p185, %p186
    %p188 = scmp.ne.s32.totalorder %s177, %s180
    %p189 = scmp.eq.s32.totalorder %s20, 1
    %p190 = por %p188, %p189
    %p191 = scmp.ne.s32.totalorder %s180, %s181
    %p192 = scmp.eq.s32.totalorder %s20, 0
    %p193 = por %p191, %p192
    %p194 = scmp.ne.s32.totalorder %s180, %s181
    %p195 = scmp.eq.s32.totalorder %s21, 1
    %p196 = por %p194, %p195
    %p198 = scmp.ne.s32.totalorder %s181, %s197
    %p199 = scmp.eq.s32.totalorder %s21, 0
    %p200 = por %p198, %p199
    %p201 = scmp.le.s32.totalorder 1, %s15
    %p202 = scmp.lt.s32.totalorder %s15, 3
    %p203 = pnand %p201, %p202
    %p204 = pneg %p203
    // Predicated region
    $region9: #{tpu_custom_call.1} parent=5 // pred_check
      _
    $region10: #{tpu_custom_call.1} parent=5 // pred_check_branch
      %206 = sbr.rel (%p203) target = $region12
    $region11: #{tpu_custom_call.1} parent=5 // pred_region
      %s207 = ssub.s32 %s15, 1
      // Predicated region
      $region13: #{tpu_custom_call.1} parent=11 // pred_check
        %p208 = pneg %p62
      $region14: #{tpu_custom_call.1} parent=11 // pred_check_branch
        %210 = sbr.rel (%p208) target = $region16
      $region15: #{tpu_custom_call.1} parent=11 // pred_region
        _
      $region16: #{tpu_custom_call.1} parent=11 // pred_fallthru
        _
      // Predicated region
      $region17: #{tpu_custom_call.1} parent=11 // pred_check
        %p211 = pneg %p83
      $region18: #{tpu_custom_call.1} parent=11 // pred_check_branch
        %213 = sbr.rel (%p211) target = $region20
      $region19: #{tpu_custom_call.1} parent=11 // pred_region
        _
      $region20: #{tpu_custom_call.1} parent=11 // pred_fallthru
        _
      // Predicated region
      $region21: #{tpu_custom_call.1} parent=11 // pred_check
        %p214 = pneg %p104
      $region22: #{tpu_custom_call.1} parent=11 // pred_check_branch
        %216 = sbr.rel (%p214) target = $region24
      $region23: #{tpu_custom_call.1} parent=11 // pred_region
        _
      $region24: #{tpu_custom_call.1} parent=11 // pred_fallthru
        _
      // Predicated region
      $region25: #{tpu_custom_call.1} parent=11 // pred_check
        %p217 = pneg %p125
      $region26: #{tpu_custom_call.1} parent=11 // pred_check_branch
        %219 = sbr.rel (%p217) target = $region28
      $region27: #{tpu_custom_call.1} parent=11 // pred_region
        _
      $region28: #{tpu_custom_call.1} parent=11 // pred_fallthru
        _
      // Predicated region
      $region29: #{tpu_custom_call.1} parent=11 // pred_check
        %p220 = pneg %p146
      $region30: #{tpu_custom_call.1} parent=11 // pred_check_branch
        %222 = sbr.rel (%p220) target = $region32
      $region31: #{tpu_custom_call.1} parent=11 // pred_region
        _
      $region32: #{tpu_custom_call.1} parent=11 // pred_fallthru
        _
      // Predicated region
      $region33: #{tpu_custom_call.1} parent=11 // pred_check
        %p223 = pneg %p167
      $region34: #{tpu_custom_call.1} parent=11 // pred_check_branch
        %225 = sbr.rel (%p223) target = $region36
      $region35: #{tpu_custom_call.1} parent=11 // pred_region
        _
      $region36: #{tpu_custom_call.1} parent=11 // pred_fallthru
        _
    $region12: #{tpu_custom_call.1} parent=5 // pred_fallthru
      _
    %p226 = scmp.lt.s32.totalorder %s15, 2
    // Predicated region
    $region37: #{tpu_custom_call.1} parent=5 // pred_check
      %p227 = pneg %p226
    $region38: #{tpu_custom_call.1} parent=5 // pred_check_branch
      %229 = sbr.rel (%p227) target = $region40
    $region39: #{tpu_custom_call.1} parent=5 // pred_region
      // Predicated region
      $region41: #{tpu_custom_call.1} parent=39 // pred_check
        %p230 = pneg %p35
      $region42: #{tpu_custom_call.1} parent=39 // pred_check_branch
        %232 = sbr.rel (%p230) target = $region44
      $region43: #{tpu_custom_call.1} parent=39 // pred_region
        %s233 = smul.u32 16, %s15
        %p234 = scmp.lt.s32.totalorder %s233, 31
        %s235 = scalar_select %p234, %s233, 31
        %s236 = smul.addr %s235, 8
        %s237 = scalar_lea.vmem %s0, %s236
        %s238 = smul.u32 16, %s15
      $region44: #{tpu_custom_call.1} parent=39 // pred_fallthru
        _
    $region40: #{tpu_custom_call.1} parent=5 // pred_fallthru
      _
    %p239 = scmp.le.s32.totalorder 1, %s15
    %p240 = scmp.lt.s32.totalorder %s15, 3
    %p241 = pnand %p239, %p240
    %p242 = pneg %p241
    // Predicated region
    $region45: #{tpu_custom_call.1} parent=5 // pred_check
      _
    $region46: #{tpu_custom_call.1} parent=5 // pred_check_branch
      %244 = sbr.rel (%p241) target = $region48
    $region47: #{tpu_custom_call.1} parent=5 // pred_region
      %s245 = ssub.s32 %s15, 1
      %s246 = smul.u32 16, %s20
      %p247 = scmp.lt.s32.totalorder %s246, 31
      %s248 = scalar_select %p247, %s246, 31
      %s249 = smul.addr %s248, 8
      %s250 = scalar_lea.vmem %s0, %s249
      %p251 = pneg %p41
      %p252 = pneg %p38
      %p253 = pneg %p62
      %p254 = pneg %p59
      %p255 = pneg %p83
      %p256 = pneg %p80
      %p257 = pneg %p104
      %p258 = pneg %p101
      %p259 = pneg %p125
      %p260 = pneg %p122
      %p261 = pneg %p146
      %p262 = pneg %p143
      %p263 = pneg %p167
      %p264 = pneg %p164
      %p265 = pneg %p193
      %p266 = pneg %p190
      %s267 = smul.u32 16, %s20
      %p268 = scmp.lt.s32.totalorder %s267, 31
      %s269 = scalar_select %p268, %s267, 31
      %s270 = smul.addr %s269, 8
      %s271 = scalar_lea.vmem %s7, %s270
      %s272 = smul.u32 16, %s20
      %p273 = scmp.lt.s32.totalorder %s272, 31
      %s274 = scalar_select %p273, %s272, 31
      %s275 = smul.addr %s274, 8
      %s276 = scalar_lea.vmem %s0, %s275
      %s277 = smul.u32 16, %s20
      %s278 = smul.u32 16, %s20
      %p279 = scmp.lt.s32.totalorder %s278, 31
      %s280 = scalar_select %p279, %s278, 31
      %s281 = smul.addr %s280, 8
      %s282 = scalar_lea.vmem %s7, %s281
      %s283 = smul.u32 16, %s20
      %v285 = vld [vmem:[%s276] sm:$0xff]
      %v286 = vld [vmem:[%s276 + $0x8] sm:$0xff]
      %v287 = vld [vmem:[%s276 + $0x10] sm:$0xff]
      %v288 = vld [vmem:[%s276 + $0x18] sm:$0xff]
      %v289 = vld [vmem:[%s276 + $0x20] sm:$0xff]
      %v290 = vld [vmem:[%s276 + $0x28] sm:$0xff]
      %v291 = vld [vmem:[%s276 + $0x30] sm:$0xff]
      %v292 = vld [vmem:[%s276 + $0x38] sm:$0xff]
      %v293 = vld [vmem:[%s276 + $0x40] sm:$0xff]
      %v294 = vld [vmem:[%s276 + $0x48] sm:$0xff]
      %v295 = vld [vmem:[%s276 + $0x50] sm:$0xff]
      %v296 = vld [vmem:[%s276 + $0x58] sm:$0xff]
      %v297 = vld [vmem:[%s276 + $0x60] sm:$0xff]
      %v298 = vld [vmem:[%s276 + $0x68] sm:$0xff]
      %v299 = vld [vmem:[%s276 + $0x70] sm:$0xff]
      %v300 = vld [vmem:[%s276 + $0x78] sm:$0xff]
      %v301 = vpack.c.bf16 %v286, %v285
      %v302 = vpack.c.bf16 %v288, %v287
      %v303 = vpack.c.bf16 %v290, %v289
      %v304 = vpack.c.bf16 %v292, %v291
      %v305 = vpack.c.bf16 %v294, %v293
      %v306 = vpack.c.bf16 %v296, %v295
      %v307 = vpack.c.bf16 %v298, %v297
      %v308 = vpack.c.bf16 %v300, %v299
      %v309 = vld [vmem:[%s1] sm:$0xff]
      %v310 = vld [vmem:[%s1 + $0x8] sm:$0xf]
      %v311 = vld [vmem:[%s1 + $0xc] sm:$0xff]
      %v312 = vld [vmem:[%s1 + $0x14] sm:$0xf]
      %v313 = vld [vmem:[%s1 + $0x18] sm:$0xff]
      %v314 = vld [vmem:[%s1 + $0x20] sm:$0xf]
      %v315 = vld [vmem:[%s1 + $0x24] sm:$0xff]
      %v316 = vld [vmem:[%s1 + $0x2c] sm:$0xf]
      %v317 = vld [vmem:[%s1 + $0x30] sm:$0xff]
      %v318 = vld [vmem:[%s1 + $0x38] sm:$0xf]
      %v319 = vld [vmem:[%s1 + $0x3c] sm:$0xff]
      %v320 = vld [vmem:[%s1 + $0x44] sm:$0xf]
      %v321 = vld [vmem:[%s1 + $0x48] sm:$0xff]
      %v322 = vld [vmem:[%s1 + $0x50] sm:$0xf]
      %v323 = vld [vmem:[%s1 + $0x54] sm:$0xff]
      %v324 = vld [vmem:[%s1 + $0x5c] sm:$0xf]
      %v325 = vld [vmem:[%s2] sm:$0x7]
      %v327 = vperm.slane %v325, 0
      %v328 = vperm.slane %v325, 1
      %v329 = vperm.slane %v325, 2
      %v349 = vunpack.c.l.b16 %v309
      %v350 = vunpack.c.h.b16 %v309
      %v351 = vunpack.c.l.b16 %v310
      %v352 = vunpack.c.l.b16 %v311
      %v353 = vunpack.c.h.b16 %v311
      %v354 = vunpack.c.l.b16 %v312
      %v355 = vunpack.c.l.b16 %v313
      %v356 = vunpack.c.h.b16 %v313
      %v357 = vunpack.c.l.b16 %v314
      %v358 = vunpack.c.l.b16 %v315
      %v359 = vunpack.c.h.b16 %v315
      %v360 = vunpack.c.l.b16 %v316
      %v361 = vunpack.c.l.b16 %v317
      %v362 = vunpack.c.h.b16 %v317
      %v363 = vunpack.c.l.b16 %v318
      %v364 = vunpack.c.l.b16 %v319
      %v365 = vunpack.c.h.b16 %v319
      %v366 = vunpack.c.l.b16 %v320
      %v367 = vunpack.c.l.b16 %v321
      %v368 = vunpack.c.h.b16 %v321
      %v369 = vunpack.c.l.b16 %v322
      %v370 = vunpack.c.l.b16 %v323
      %v371 = vunpack.c.h.b16 %v323
      %v372 = vunpack.c.l.b16 %v324
      %v373 = vpack.c.b16 %v352, %v349
      %v374 = vpack.c.b16 %v353, %v350
      %v375 = vpack.c.b16 %v354, %v351
      %v376 = vpack.c.b16 %v358, %v355
      %v377 = vpack.c.b16 %v359, %v356
      %v378 = vpack.c.b16 %v360, %v357
      %v379 = vpack.c.b16 %v364, %v361
      %v380 = vpack.c.b16 %v365, %v362
      %v381 = vpack.c.b16 %v366, %v363
      %v382 = vpack.c.b16 %v370, %v367
      %v383 = vpack.c.b16 %v371, %v368
      %v384 = vpack.c.b16 %v372, %v369
      %vm397 = vcmask 523264
      %v399 = vsel %vm397, %v301, 0
      %v402 = vsel %vm397, %v302, 0
      %v405 = vsel %vm397, %v303, 0
      %v408 = vsel %vm397, %v304, 0
      %v411 = vsel %vm397, %v305, 0
      %v414 = vsel %vm397, %v306, 0
      %v417 = vsel %vm397, %v307, 0
      %v420 = vsel %vm397, %v308, 0
      %422 = vmatpush.bf16.msra.mxu0 0
      %423 = vmatpush.bf16.msra.mxu0 0
      %424 = vmatpush.bf16.msra.mxu0 0
      %425 = vmatpush.bf16.msra.mxu0 0
      %426 = vmatpush.bf16.msra.mxu0 %v382
      %427 = vmatpush.bf16.msra.mxu0 %v379
      %428 = vmatpush.bf16.msra.mxu0 %v376
      %429 = vmatpush.bf16.msra.mxu0 %v373
      %430 = vmatmul.bf16.gmra.mxu0 %v399
      %v431 = vpop.f32.mrf.mxu0
      %v432 = vadd.f32 %v327, %v431
      %v433 = vpop.f32.mrf.mxu0
      %v434 = vadd.f32 %v327, %v433
      %435 = vmatmul.bf16.gmra.mxu0 %v402
      %v436 = vpop.f32.mrf.mxu0
      %v437 = vadd.f32 %v327, %v436
      %v438 = vpop.f32.mrf.mxu0
      %v439 = vadd.f32 %v327, %v438
      %440 = vmatmul.bf16.gmra.mxu0 %v405
      %v441 = vpop.f32.mrf.mxu0
      %v442 = vadd.f32 %v327, %v441
      %v443 = vpop.f32.mrf.mxu0
      %v444 = vadd.f32 %v327, %v443
      %445 = vmatmul.bf16.gmra.mxu0 %v408
      %v446 = vpop.f32.mrf.mxu0
      %v447 = vadd.f32 %v327, %v446
      %v448 = vpop.f32.mrf.mxu0
      %v449 = vadd.f32 %v327, %v448
      %450 = vmatmul.bf16.gmra.mxu0 %v411
      %v451 = vpop.f32.mrf.mxu0
      %v452 = vadd.f32 %v327, %v451
      %v453 = vpop.f32.mrf.mxu0
      %v454 = vadd.f32 %v327, %v453
      %455 = vmatmul.bf16.gmra.mxu0 %v414
      %v456 = vpop.f32.mrf.mxu0
      %v457 = vadd.f32 %v327, %v456
      %v458 = vpop.f32.mrf.mxu0
      %v459 = vadd.f32 %v327, %v458
      %460 = vmatmul.bf16.gmra.mxu0 %v417
      %v461 = vpop.f32.mrf.mxu0
      %v462 = vadd.f32 %v327, %v461
      %v463 = vpop.f32.mrf.mxu0
      %v464 = vadd.f32 %v327, %v463
      %465 = vmatmul.bf16.gmra.mxu0 %v420
      %v466 = vpop.f32.mrf.mxu0
      %v467 = vadd.f32 %v327, %v466
      %v468 = vpop.f32.mrf.mxu0
      %v469 = vadd.f32 %v327, %v468
      %470 = vdwg.mxu0
      %471 = vmatpush.bf16.msra.mxu0 0
      %472 = vmatpush.bf16.msra.mxu0 0
      %473 = vmatpush.bf16.msra.mxu0 0
      %474 = vmatpush.bf16.msra.mxu0 0
      %475 = vmatpush.bf16.msra.mxu0 %v383
      %476 = vmatpush.bf16.msra.mxu0 %v380
      %477 = vmatpush.bf16.msra.mxu0 %v377
      %478 = vmatpush.bf16.msra.mxu0 %v374
      %479 = vmatmul.bf16.gmra.mxu0 %v399
      %v480 = vpop.f32.mrf.mxu0
      %v481 = vadd.f32 %v328, %v480
      %v482 = vpop.f32.mrf.mxu0
      %v483 = vadd.f32 %v328, %v482
      %484 = vmatmul.bf16.gmra.mxu0 %v402
      %v485 = vpop.f32.mrf.mxu0
      %v486 = vadd.f32 %v328, %v485
      %v487 = vpop.f32.mrf.mxu0
      %v488 = vadd.f32 %v328, %v487
      %489 = vmatmul.bf16.gmra.mxu0 %v405
      %v490 = vpop.f32.mrf.mxu0
      %v491 = vadd.f32 %v328, %v490
      %v492 = vpop.f32.mrf.mxu0
      %v493 = vadd.f32 %v328, %v492
      %494 = vmatmul.bf16.gmra.mxu0 %v408
      %v495 = vpop.f32.mrf.mxu0
      %v496 = vadd.f32 %v328, %v495
      %v497 = vpop.f32.mrf.mxu0
      %v498 = vadd.f32 %v328, %v497
      %499 = vmatmul.bf16.gmra.mxu0 %v411
      %v500 = vpop.f32.mrf.mxu0
      %v501 = vadd.f32 %v328, %v500
      %v502 = vpop.f32.mrf.mxu0
      %v503 = vadd.f32 %v328, %v502
      %504 = vmatmul.bf16.gmra.mxu0 %v414
      %v505 = vpop.f32.mrf.mxu0
      %v506 = vadd.f32 %v328, %v505
      %v507 = vpop.f32.mrf.mxu0
      %v508 = vadd.f32 %v328, %v507
      %509 = vmatmul.bf16.gmra.mxu0 %v417
      %v510 = vpop.f32.mrf.mxu0
      %v511 = vadd.f32 %v328, %v510
      %v512 = vpop.f32.mrf.mxu0
      %v513 = vadd.f32 %v328, %v512
      %514 = vmatmul.bf16.gmra.mxu0 %v420
      %v515 = vpop.f32.mrf.mxu0
      %v516 = vadd.f32 %v328, %v515
      %v517 = vpop.f32.mrf.mxu0
      %v518 = vadd.f32 %v328, %v517
      %519 = vdwg.mxu0
      %520 = vmatpush.bf16.msra.mxu0 0
      %521 = vmatpush.bf16.msra.mxu0 0
      %522 = vmatpush.bf16.msra.mxu0 0
      %523 = vmatpush.bf16.msra.mxu0 0
      %524 = vmatpush.bf16.msra.mxu0 %v384
      %525 = vmatpush.bf16.msra.mxu0 %v381
      %526 = vmatpush.bf16.msra.mxu0 %v378
      %527 = vmatpush.bf16.msra.mxu0 %v375
      %528 = vmatmul.bf16.gmra.mxu0 %v399
      %v529 = vpop.f32.mrf.mxu0
      %v530 = vadd.f32 %v329, %v529
      %v531 = vpop.f32.mrf.mxu0
      %v532 = vadd.f32 %v329, %v531
      %533 = vmatmul.bf16.gmra.mxu0 %v402
      %v534 = vpop.f32.mrf.mxu0
      %v535 = vadd.f32 %v329, %v534
      %v536 = vpop.f32.mrf.mxu0
      %v537 = vadd.f32 %v329, %v536
      %538 = vmatmul.bf16.gmra.mxu0 %v405
      %v539 = vpop.f32.mrf.mxu0
      %v540 = vadd.f32 %v329, %v539
      %v541 = vpop.f32.mrf.mxu0
      %v542 = vadd.f32 %v329, %v541
      %543 = vmatmul.bf16.gmra.mxu0 %v408
      %v544 = vpop.f32.mrf.mxu0
      %v545 = vadd.f32 %v329, %v544
      %v546 = vpop.f32.mrf.mxu0
      %v547 = vadd.f32 %v329, %v546
      %548 = vmatmul.bf16.gmra.mxu0 %v411
      %v549 = vpop.f32.mrf.mxu0
      %v550 = vadd.f32 %v329, %v549
      %v551 = vpop.f32.mrf.mxu0
      %v552 = vadd.f32 %v329, %v551
      %553 = vmatmul.bf16.gmra.mxu0 %v414
      %v554 = vpop.f32.mrf.mxu0
      %v555 = vadd.f32 %v329, %v554
      %v556 = vpop.f32.mrf.mxu0
      %v557 = vadd.f32 %v329, %v556
      %558 = vmatmul.bf16.gmra.mxu0 %v417
      %v559 = vpop.f32.mrf.mxu0
      %v560 = vadd.f32 %v329, %v559
      %v561 = vpop.f32.mrf.mxu0
      %v562 = vadd.f32 %v329, %v561
      %563 = vmatmul.bf16.gmra.mxu0 %v420
      %v564 = vpop.f32.mrf.mxu0
      %v565 = vadd.f32 %v329, %v564
      %v566 = vpop.f32.mrf.mxu0
      %v567 = vadd.f32 %v329, %v566
      %568 = vdwg.mxu0
      %v569 = vtanh.pop %v432
      %v570 = vtanh.pop %v481
      %v571 = vtanh.pop %v434
      %v572 = vtanh.pop %v483
      %v573 = vtanh.pop %v437
      %v574 = vtanh.pop %v486
      %v575 = vtanh.pop %v439
      %v576 = vtanh.pop %v488
      %v577 = vtanh.pop %v442
      %v578 = vtanh.pop %v491
      %v579 = vtanh.pop %v444
      %v580 = vtanh.pop %v493
      %v581 = vtanh.pop %v447
      %v582 = vtanh.pop %v496
      %v583 = vtanh.pop %v449
      %v584 = vtanh.pop %v498
      %v585 = vtanh.pop %v452
      %v586 = vtanh.pop %v501
      %v587 = vtanh.pop %v454
      %v588 = vtanh.pop %v503
      %v589 = vtanh.pop %v457
      %v590 = vtanh.pop %v506
      %v591 = vtanh.pop %v459
      %v592 = vtanh.pop %v508
      %v593 = vtanh.pop %v462
      %v594 = vtanh.pop %v511
      %v595 = vtanh.pop %v464
      %v596 = vtanh.pop %v513
      %v597 = vtanh.pop %v467
      %v598 = vtanh.pop %v516
      %v599 = vtanh.pop %v469
      %v600 = vtanh.pop %v518
      %v601 = vpack.c.bf16 %v571, %v569
      %v602 = vpack.c.bf16 %v572, %v570
      %v603 = vpack.c.bf16 %v575, %v573
      %v604 = vpack.c.bf16 %v576, %v574
      %v605 = vpack.c.bf16 %v579, %v577
      %v606 = vpack.c.bf16 %v580, %v578
      %v607 = vpack.c.bf16 %v583, %v581
      %v608 = vpack.c.bf16 %v584, %v582
      %v609 = vpack.c.bf16 %v587, %v585
      %v610 = vpack.c.bf16 %v588, %v586
      %v611 = vpack.c.bf16 %v591, %v589
      %v612 = vpack.c.bf16 %v592, %v590
      %v613 = vpack.c.bf16 %v595, %v593
      %v614 = vpack.c.bf16 %v596, %v594
      %v615 = vpack.c.bf16 %v599, %v597
      %v616 = vpack.c.bf16 %v600, %v598
      %v617 = vld [vmem:[%s3] sm:$0xf]
      %v618 = vld [vmem:[%s3 + $0x4] sm:$0xf]
      %v619 = vld [vmem:[%s3 + $0x8] sm:$0xf]
      %v620 = vld [vmem:[%s3 + $0xc] sm:$0xf]
      %v621 = vld [vmem:[%s3 + $0x10] sm:$0xf]
      %v622 = vld [vmem:[%s3 + $0x14] sm:$0xf]
      %v623 = vld [vmem:[%s3 + $0x18] sm:$0xf]
      %v624 = vld [vmem:[%s3 + $0x1c] sm:$0xf]
      %v625 = vld [vmem:[%s3 + $0x20] sm:$0xf]
      %v626 = vld [vmem:[%s3 + $0x24] sm:$0xf]
      %v627 = vld [vmem:[%s3 + $0x28] sm:$0xf]
      %v628 = vld [vmem:[%s3 + $0x2c] sm:$0xf]
      %v629 = vld [vmem:[%s3 + $0x30] sm:$0xf]
      %v630 = vld [vmem:[%s3 + $0x34] sm:$0xf]
      %v631 = vld [vmem:[%s3 + $0x38] sm:$0xf]
      %v632 = vld [vmem:[%s3 + $0x3c] sm:$0xf]
      %v633 = vld [vmem:[%s3 + $0x40] sm:$0xf]
      %v634 = vld [vmem:[%s3 + $0x44] sm:$0xf]
      %v635 = vld [vmem:[%s3 + $0x48] sm:$0xf]
      %v636 = vld [vmem:[%s3 + $0x4c] sm:$0xf]
      %v637 = vld [vmem:[%s3 + $0x50] sm:$0xf]
      %v638 = vld [vmem:[%s3 + $0x54] sm:$0xf]
      %v639 = vld [vmem:[%s3 + $0x58] sm:$0xf]
      %v640 = vld [vmem:[%s3 + $0x5c] sm:$0xf]
      %v641 = vld [vmem:[%s3 + $0x60] sm:$0xf]
      %v642 = vld [vmem:[%s3 + $0x64] sm:$0xf]
      %v643 = vld [vmem:[%s3 + $0x68] sm:$0xf]
      %v644 = vld [vmem:[%s3 + $0x6c] sm:$0xf]
      %v645 = vld [vmem:[%s3 + $0x70] sm:$0xf]
      %v646 = vld [vmem:[%s3 + $0x74] sm:$0xf]
      %v647 = vld [vmem:[%s3 + $0x78] sm:$0xf]
      %v648 = vld [vmem:[%s3 + $0x7c] sm:$0xf]
      %v649 = vld [vmem:[%s4] sm:$0x1]
      %v651 = vperm.slane %v649, 0
      %v685 = vunpack.c.l.b16 %v617
      %v686 = vunpack.c.l.b16 %v618
      %v687 = vunpack.c.l.b16 %v619
      %v688 = vunpack.c.l.b16 %v620
      %v689 = vunpack.c.l.b16 %v621
      %v690 = vunpack.c.l.b16 %v622
      %v691 = vunpack.c.l.b16 %v623
      %v692 = vunpack.c.l.b16 %v624
      %v693 = vunpack.c.l.b16 %v625
      %v694 = vunpack.c.l.b16 %v626
      %v695 = vunpack.c.l.b16 %v627
      %v696 = vunpack.c.l.b16 %v628
      %v697 = vunpack.c.l.b16 %v629
      %v698 = vunpack.c.l.b16 %v630
      %v699 = vunpack.c.l.b16 %v631
      %v700 = vunpack.c.l.b16 %v632
      %v701 = vunpack.c.l.b16 %v633
      %v702 = vunpack.c.l.b16 %v634
      %v703 = vunpack.c.l.b16 %v635
      %v704 = vunpack.c.l.b16 %v636
      %v705 = vunpack.c.l.b16 %v637
      %v706 = vunpack.c.l.b16 %v638
      %v707 = vunpack.c.l.b16 %v639
      %v708 = vunpack.c.l.b16 %v640
      %v709 = vunpack.c.l.b16 %v641
      %v710 = vunpack.c.l.b16 %v642
      %v711 = vunpack.c.l.b16 %v643
      %v712 = vunpack.c.l.b16 %v644
      %v713 = vunpack.c.l.b16 %v645
      %v714 = vunpack.c.l.b16 %v646
      %v715 = vunpack.c.l.b16 %v647
      %v716 = vunpack.c.l.b16 %v648
      %v717 = vpack.c.b16 %v686, %v685
      %v718 = vpack.c.b16 %v688, %v687
      %v719 = vpack.c.b16 %v690, %v689
      %v720 = vpack.c.b16 %v692, %v691
      %v721 = vpack.c.b16 %v694, %v693
      %v722 = vpack.c.b16 %v696, %v695
      %v723 = vpack.c.b16 %v698, %v697
      %v724 = vpack.c.b16 %v700, %v699
      %v725 = vpack.c.b16 %v702, %v701
      %v726 = vpack.c.b16 %v704, %v703
      %v727 = vpack.c.b16 %v706, %v705
      %v728 = vpack.c.b16 %v708, %v707
      %v729 = vpack.c.b16 %v710, %v709
      %v730 = vpack.c.b16 %v712, %v711
      %v731 = vpack.c.b16 %v714, %v713
      %v732 = vpack.c.b16 %v716, %v715
      %749 = vmatpush.bf16.msra.mxu0 %v724
      %750 = vmatpush.bf16.msra.mxu0 %v723
      %751 = vmatpush.bf16.msra.mxu0 %v722
      %752 = vmatpush.bf16.msra.mxu0 %v721
      %753 = vmatpush.bf16.msra.mxu0 %v720
      %754 = vmatpush.bf16.msra.mxu0 %v719
      %755 = vmatpush.bf16.msra.mxu0 %v718
      %756 = vmatpush.bf16.msra.mxu0 %v717
      %757 = vmatmul.bf16.gmra.mxu0 %v601
      %v758 = vpop.f32.mrf.mxu0
      %v759 = vadd.f32 %v651, %v758
      %v760 = vpop.f32.mrf.mxu0
      %v761 = vadd.f32 %v651, %v760
      %762 = vmatmul.bf16.gmra.mxu0 %v603
      %v763 = vpop.f32.mrf.mxu0
      %v764 = vadd.f32 %v651, %v763
      %v765 = vpop.f32.mrf.mxu0
      %v766 = vadd.f32 %v651, %v765
      %767 = vmatmul.bf16.gmra.mxu0 %v605
      %v768 = vpop.f32.mrf.mxu0
      %v769 = vadd.f32 %v651, %v768
      %v770 = vpop.f32.mrf.mxu0
      %v771 = vadd.f32 %v651, %v770
      %772 = vmatmul.bf16.gmra.mxu0 %v607
      %v773 = vpop.f32.mrf.mxu0
      %v774 = vadd.f32 %v651, %v773
      %v775 = vpop.f32.mrf.mxu0
      %v776 = vadd.f32 %v651, %v775
      %777 = vmatmul.bf16.gmra.mxu0 %v609
      %v778 = vpop.f32.mrf.mxu0
      %v779 = vadd.f32 %v651, %v778
      %v780 = vpop.f32.mrf.mxu0
      %v781 = vadd.f32 %v651, %v780
      %782 = vmatmul.bf16.gmra.mxu0 %v611
      %v783 = vpop.f32.mrf.mxu0
      %v784 = vadd.f32 %v651, %v783
      %v785 = vpop.f32.mrf.mxu0
      %v786 = vadd.f32 %v651, %v785
      %787 = vmatmul.bf16.gmra.mxu0 %v613
      %v788 = vpop.f32.mrf.mxu0
      %v789 = vadd.f32 %v651, %v788
      %v790 = vpop.f32.mrf.mxu0
      %v791 = vadd.f32 %v651, %v790
      %792 = vmatmul.bf16.gmra.mxu0 %v615
      %v793 = vpop.f32.mrf.mxu0
      %v794 = vadd.f32 %v651, %v793
      %v795 = vpop.f32.mrf.mxu0
      %v796 = vadd.f32 %v651, %v795
      %797 = vdwg.mxu0
      %798 = vmatpush.bf16.msra.mxu0 %v732
      %799 = vmatpush.bf16.msra.mxu0 %v731
      %800 = vmatpush.bf16.msra.mxu0 %v730
      %801 = vmatpush.bf16.msra.mxu0 %v729
      %802 = vmatpush.bf16.msra.mxu0 %v728
      %803 = vmatpush.bf16.msra.mxu0 %v727
      %804 = vmatpush.bf16.msra.mxu0 %v726
      %805 = vmatpush.bf16.msra.mxu0 %v725
      %806 = vmatmul.bf16.gmra.mxu0 %v602
      %v807 = vpop.f32.mrf.mxu0
      %v808 = vadd.f32 %v759, %v807
      %v809 = vpop.f32.mrf.mxu0
      %v810 = vadd.f32 %v761, %v809
      %811 = vmatmul.bf16.gmra.mxu0 %v604
      %v812 = vpop.f32.mrf.mxu0
      %v813 = vadd.f32 %v764, %v812
      %v814 = vpop.f32.mrf.mxu0
      %v815 = vadd.f32 %v766, %v814
      %816 = vmatmul.bf16.gmra.mxu0 %v606
      %v817 = vpop.f32.mrf.mxu0
      %v818 = vadd.f32 %v769, %v817
      %v819 = vpop.f32.mrf.mxu0
      %v820 = vadd.f32 %v771, %v819
      %821 = vmatmul.bf16.gmra.mxu0 %v608
      %v822 = vpop.f32.mrf.mxu0
      %v823 = vadd.f32 %v774, %v822
      %v824 = vpop.f32.mrf.mxu0
      %v825 = vadd.f32 %v776, %v824
      %826 = vmatmul.bf16.gmra.mxu0 %v610
      %v827 = vpop.f32.mrf.mxu0
      %v828 = vadd.f32 %v779, %v827
      %v829 = vpop.f32.mrf.mxu0
      %v830 = vadd.f32 %v781, %v829
      %831 = vmatmul.bf16.gmra.mxu0 %v612
      %v832 = vpop.f32.mrf.mxu0
      %v833 = vadd.f32 %v784, %v832
      %v834 = vpop.f32.mrf.mxu0
      %v835 = vadd.f32 %v786, %v834
      %836 = vmatmul.bf16.gmra.mxu0 %v614
      %v837 = vpop.f32.mrf.mxu0
      %v838 = vadd.f32 %v789, %v837
      %v839 = vpop.f32.mrf.mxu0
      %v840 = vadd.f32 %v791, %v839
      %841 = vmatmul.bf16.gmra.mxu0 %v616
      %v842 = vpop.f32.mrf.mxu0
      %v843 = vadd.f32 %v794, %v842
      %v844 = vpop.f32.mrf.mxu0
      %v845 = vadd.f32 %v796, %v844
      %846 = vdwg.mxu0
      %v847 = vtanh.pop %v530
      %v848 = vtanh.pop %v532
      %v849 = vtanh.pop %v535
      %v850 = vtanh.pop %v537
      %v851 = vtanh.pop %v540
      %v852 = vtanh.pop %v542
      %v853 = vtanh.pop %v545
      %v854 = vtanh.pop %v547
      %v855 = vtanh.pop %v550
      %v856 = vtanh.pop %v552
      %v857 = vtanh.pop %v555
      %v858 = vtanh.pop %v557
      %v859 = vtanh.pop %v560
      %v860 = vtanh.pop %v562
      %v861 = vtanh.pop %v565
      %v862 = vtanh.pop %v567
      %v863 = vld [vmem:[%s5] sm:$0x1]
      %v865 = vperm.slane %v863, 0
      %v867 = vmul.f32 %v847, %v865
      %v868 = vmul.f32 %v848, %v865
      %v869 = vmul.f32 %v849, %v865
      %v870 = vmul.f32 %v850, %v865
      %v871 = vmul.f32 %v851, %v865
      %v872 = vmul.f32 %v852, %v865
      %v873 = vmul.f32 %v853, %v865
      %v874 = vmul.f32 %v854, %v865
      %v875 = vmul.f32 %v855, %v865
      %v876 = vmul.f32 %v856, %v865
      %v877 = vmul.f32 %v857, %v865
      %v878 = vmul.f32 %v858, %v865
      %v879 = vmul.f32 %v859, %v865
      %v880 = vmul.f32 %v860, %v865
      %v881 = vmul.f32 %v861, %v865
      %v882 = vmul.f32 %v862, %v865
      %883 = vadd.xlane.f32.xlu0 %v867
      %v884 = vpop.xlane.xlu0 %883
      %885 = vadd.xlane.f32.xlu0 %v868
      %v886 = vpop.xlane.xlu0 %885
      %887 = vadd.xlane.f32.xlu0 %v869
      %v888 = vpop.xlane.xlu0 %887
      %889 = vadd.xlane.f32.xlu0 %v870
      %v890 = vpop.xlane.xlu0 %889
      %891 = vadd.xlane.f32.xlu0 %v871
      %v892 = vpop.xlane.xlu0 %891
      %893 = vadd.xlane.f32.xlu0 %v872
      %v894 = vpop.xlane.xlu0 %893
      %895 = vadd.xlane.f32.xlu0 %v873
      %v896 = vpop.xlane.xlu0 %895
      %897 = vadd.xlane.f32.xlu0 %v874
      %v898 = vpop.xlane.xlu0 %897
      %899 = vadd.xlane.f32.xlu0 %v875
      %v900 = vpop.xlane.xlu0 %899
      %901 = vadd.xlane.f32.xlu0 %v876
      %v902 = vpop.xlane.xlu0 %901
      %903 = vadd.xlane.f32.xlu0 %v877
      %v904 = vpop.xlane.xlu0 %903
      %905 = vadd.xlane.f32.xlu0 %v878
      %v906 = vpop.xlane.xlu0 %905
      %907 = vadd.xlane.f32.xlu0 %v879
      %v908 = vpop.xlane.xlu0 %907
      %909 = vadd.xlane.f32.xlu0 %v880
      %v910 = vpop.xlane.xlu0 %909
      %911 = vadd.xlane.f32.xlu0 %v881
      %v912 = vpop.xlane.xlu0 %911
      %913 = vadd.xlane.f32.xlu0 %v882
      %v914 = vpop.xlane.xlu0 %913
      %v915 = vld [vmem:[#allocation2] sm:$0x1]
      %v917 = vperm.slane %v915, 0
      %v919 = vadd.f32 %v884, %v917
      %v920 = vadd.f32 %v886, %v917
      %v921 = vadd.f32 %v888, %v917
      %v922 = vadd.f32 %v890, %v917
      %v923 = vadd.f32 %v892, %v917
      %v924 = vadd.f32 %v894, %v917
      %v925 = vadd.f32 %v896, %v917
      %v926 = vadd.f32 %v898, %v917
      %v927 = vadd.f32 %v900, %v917
      %v928 = vadd.f32 %v902, %v917
      %v929 = vadd.f32 %v904, %v917
      %v930 = vadd.f32 %v906, %v917
      %v931 = vadd.f32 %v908, %v917
      %v932 = vadd.f32 %v910, %v917
      %v933 = vadd.f32 %v912, %v917
      %v934 = vadd.f32 %v914, %v917
      %v935 = vxor.u32 %v919, 2147483648
      %v936 = vxor.u32 %v920, 2147483648
      %v937 = vxor.u32 %v921, 2147483648
      %v938 = vxor.u32 %v922, 2147483648
      %v939 = vxor.u32 %v923, 2147483648
      %v940 = vxor.u32 %v924, 2147483648
      %v941 = vxor.u32 %v925, 2147483648
      %v942 = vxor.u32 %v926, 2147483648
      %v943 = vxor.u32 %v927, 2147483648
      %v944 = vxor.u32 %v928, 2147483648
      %v945 = vxor.u32 %v929, 2147483648
      %v946 = vxor.u32 %v930, 2147483648
      %v947 = vxor.u32 %v931, 2147483648
      %v948 = vxor.u32 %v932, 2147483648
      %v949 = vxor.u32 %v933, 2147483648
      %v950 = vxor.u32 %v934, 2147483648
      %v951 = vmul.f32 %v935, 1.442695
      %v952 = vpow.pop %v951
      %v953 = vmul.f32 %v936, 1.442695
      %v954 = vpow.pop %v953
      %v955 = vmul.f32 %v937, 1.442695
      %v956 = vpow.pop %v955
      %v957 = vmul.f32 %v938, 1.442695
      %v958 = vpow.pop %v957
      %v959 = vmul.f32 %v939, 1.442695
      %v960 = vpow.pop %v959
      %v961 = vmul.f32 %v940, 1.442695
      %v962 = vpow.pop %v961
      %v963 = vmul.f32 %v941, 1.442695
      %v964 = vpow.pop %v963
      %v965 = vmul.f32 %v942, 1.442695
      %v966 = vpow.pop %v965
      %v967 = vmul.f32 %v943, 1.442695
      %v968 = vpow.pop %v967
      %v969 = vmul.f32 %v944, 1.442695
      %v970 = vpow.pop %v969
      %v971 = vmul.f32 %v945, 1.442695
      %v972 = vpow.pop %v971
      %v973 = vmul.f32 %v946, 1.442695
      %v974 = vpow.pop %v973
      %v975 = vmul.f32 %v947, 1.442695
      %v976 = vpow.pop %v975
      %v977 = vmul.f32 %v948, 1.442695
      %v978 = vpow.pop %v977
      %v979 = vmul.f32 %v949, 1.442695
      %v980 = vpow.pop %v979
      %v981 = vmul.f32 %v950, 1.442695
      %v982 = vpow.pop %v981
      %v983 = vadd.f32 %v952, 1.0
      %v984 = vadd.f32 %v954, 1.0
      %v985 = vadd.f32 %v956, 1.0
      %v986 = vadd.f32 %v958, 1.0
      %v987 = vadd.f32 %v960, 1.0
      %v988 = vadd.f32 %v962, 1.0
      %v989 = vadd.f32 %v964, 1.0
      %v990 = vadd.f32 %v966, 1.0
      %v991 = vadd.f32 %v968, 1.0
      %v992 = vadd.f32 %v970, 1.0
      %v993 = vadd.f32 %v972, 1.0
      %v994 = vadd.f32 %v974, 1.0
      %v995 = vadd.f32 %v976, 1.0
      %v996 = vadd.f32 %v978, 1.0
      %v997 = vadd.f32 %v980, 1.0
      %v998 = vadd.f32 %v982, 1.0
      %v999 = vrcp.pop %v983
      %v1000 = vmul.f32 %v983, %v999
      %v1001 = vsub.f32 1.0, %v1000
      %v1002 = vmul.f32 %v999, %v1001
      %v1003 = vadd.f32 %v999, %v1002
      %vm1004 = vweird.f32 %v983
      %vm1005 = vweird.f32 %v999
      %vm1006 = vmor %vm1004, %vm1005
      %v1007 = vsel %vm1006, %v999, %v1003
      %v1008 = vand.u32 2147483647, %v983
      %vm1009 = vcmp.eq.f32.partialorder %v1008, 8.507059e+37
      %v1010 = vand.u32 %v983, 2147483648
      %v1011 = vor.u32 1.1754944e-38, %v1010
      %v1012 = vsel %vm1009, %v1011, %v1007
      %v1013 = vmul.f32 1.0, %v1012
      %v1014 = vrcp.pop %v984
      %v1015 = vmul.f32 %v984, %v1014
      %v1016 = vsub.f32 1.0, %v1015
      %v1017 = vmul.f32 %v1014, %v1016
      %v1018 = vadd.f32 %v1014, %v1017
      %vm1019 = vweird.f32 %v984
      %vm1020 = vweird.f32 %v1014
      %vm1021 = vmor %vm1019, %vm1020
      %v1022 = vsel %vm1021, %v1014, %v1018
      %v1023 = vand.u32 2147483647, %v984
      %vm1024 = vcmp.eq.f32.partialorder %v1023, 8.507059e+37
      %v1025 = vand.u32 %v984, 2147483648
      %v1026 = vor.u32 1.1754944e-38, %v1025
      %v1027 = vsel %vm1024, %v1026, %v1022
      %v1028 = vmul.f32 1.0, %v1027
      %v1029 = vrcp.pop %v985
      %v1030 = vmul.f32 %v985, %v1029
      %v1031 = vsub.f32 1.0, %v1030
      %v1032 = vmul.f32 %v1029, %v1031
      %v1033 = vadd.f32 %v1029, %v1032
      %vm1034 = vweird.f32 %v985
      %vm1035 = vweird.f32 %v1029
      %vm1036 = vmor %vm1034, %vm1035
      %v1037 = vsel %vm1036, %v1029, %v1033
      %v1038 = vand.u32 2147483647, %v985
      %vm1039 = vcmp.eq.f32.partialorder %v1038, 8.507059e+37
      %v1040 = vand.u32 %v985, 2147483648
      %v1041 = vor.u32 1.1754944e-38, %v1040
      %v1042 = vsel %vm1039, %v1041, %v1037
      %v1043 = vmul.f32 1.0, %v1042
      %v1044 = vrcp.pop %v986
      %v1045 = vmul.f32 %v986, %v1044
      %v1046 = vsub.f32 1.0, %v1045
      %v1047 = vmul.f32 %v1044, %v1046
      %v1048 = vadd.f32 %v1044, %v1047
      %vm1049 = vweird.f32 %v986
      %vm1050 = vweird.f32 %v1044
      %vm1051 = vmor %vm1049, %vm1050
      %v1052 = vsel %vm1051, %v1044, %v1048
      %v1053 = vand.u32 2147483647, %v986
      %vm1054 = vcmp.eq.f32.partialorder %v1053, 8.507059e+37
      %v1055 = vand.u32 %v986, 2147483648
      %v1056 = vor.u32 1.1754944e-38, %v1055
      %v1057 = vsel %vm1054, %v1056, %v1052
      %v1058 = vmul.f32 1.0, %v1057
      %v1059 = vrcp.pop %v987
      %v1060 = vmul.f32 %v987, %v1059
      %v1061 = vsub.f32 1.0, %v1060
      %v1062 = vmul.f32 %v1059, %v1061
      %v1063 = vadd.f32 %v1059, %v1062
      %vm1064 = vweird.f32 %v987
      %vm1065 = vweird.f32 %v1059
      %vm1066 = vmor %vm1064, %vm1065
      %v1067 = vsel %vm1066, %v1059, %v1063
      %v1068 = vand.u32 2147483647, %v987
      %vm1069 = vcmp.eq.f32.partialorder %v1068, 8.507059e+37
      %v1070 = vand.u32 %v987, 2147483648
      %v1071 = vor.u32 1.1754944e-38, %v1070
      %v1072 = vsel %vm1069, %v1071, %v1067
      %v1073 = vmul.f32 1.0, %v1072
      %v1074 = vrcp.pop %v988
      %v1075 = vmul.f32 %v988, %v1074
      %v1076 = vsub.f32 1.0, %v1075
      %v1077 = vmul.f32 %v1074, %v1076
      %v1078 = vadd.f32 %v1074, %v1077
      %vm1079 = vweird.f32 %v988
      %vm1080 = vweird.f32 %v1074
      %vm1081 = vmor %vm1079, %vm1080
      %v1082 = vsel %vm1081, %v1074, %v1078
      %v1083 = vand.u32 2147483647, %v988
      %vm1084 = vcmp.eq.f32.partialorder %v1083, 8.507059e+37
      %v1085 = vand.u32 %v988, 2147483648
      %v1086 = vor.u32 1.1754944e-38, %v1085
      %v1087 = vsel %vm1084, %v1086, %v1082
      %v1088 = vmul.f32 1.0, %v1087
      %v1089 = vrcp.pop %v989
      %v1090 = vmul.f32 %v989, %v1089
      %v1091 = vsub.f32 1.0, %v1090
      %v1092 = vmul.f32 %v1089, %v1091
      %v1093 = vadd.f32 %v1089, %v1092
      %vm1094 = vweird.f32 %v989
      %vm1095 = vweird.f32 %v1089
      %vm1096 = vmor %vm1094, %vm1095
      %v1097 = vsel %vm1096, %v1089, %v1093
      %v1098 = vand.u32 2147483647, %v989
      %vm1099 = vcmp.eq.f32.partialorder %v1098, 8.507059e+37
      %v1100 = vand.u32 %v989, 2147483648
      %v1101 = vor.u32 1.1754944e-38, %v1100
      %v1102 = vsel %vm1099, %v1101, %v1097
      %v1103 = vmul.f32 1.0, %v1102
      %v1104 = vrcp.pop %v990
      %v1105 = vmul.f32 %v990, %v1104
      %v1106 = vsub.f32 1.0, %v1105
      %v1107 = vmul.f32 %v1104, %v1106
      %v1108 = vadd.f32 %v1104, %v1107
      %vm1109 = vweird.f32 %v990
      %vm1110 = vweird.f32 %v1104
      %vm1111 = vmor %vm1109, %vm1110
      %v1112 = vsel %vm1111, %v1104, %v1108
      %v1113 = vand.u32 2147483647, %v990
      %vm1114 = vcmp.eq.f32.partialorder %v1113, 8.507059e+37
      %v1115 = vand.u32 %v990, 2147483648
      %v1116 = vor.u32 1.1754944e-38, %v1115
      %v1117 = vsel %vm1114, %v1116, %v1112
      %v1118 = vmul.f32 1.0, %v1117
      %v1119 = vrcp.pop %v991
      %v1120 = vmul.f32 %v991, %v1119
      %v1121 = vsub.f32 1.0, %v1120
      %v1122 = vmul.f32 %v1119, %v1121
      %v1123 = vadd.f32 %v1119, %v1122
      %vm1124 = vweird.f32 %v991
      %vm1125 = vweird.f32 %v1119
      %vm1126 = vmor %vm1124, %vm1125
      %v1127 = vsel %vm1126, %v1119, %v1123
      %v1128 = vand.u32 2147483647, %v991
      %vm1129 = vcmp.eq.f32.partialorder %v1128, 8.507059e+37
      %v1130 = vand.u32 %v991, 2147483648
      %v1131 = vor.u32 1.1754944e-38, %v1130
      %v1132 = vsel %vm1129, %v1131, %v1127
      %v1133 = vmul.f32 1.0, %v1132
      %v1134 = vrcp.pop %v992
      %v1135 = vmul.f32 %v992, %v1134
      %v1136 = vsub.f32 1.0, %v1135
      %v1137 = vmul.f32 %v1134, %v1136
      %v1138 = vadd.f32 %v1134, %v1137
      %vm1139 = vweird.f32 %v992
      %vm1140 = vweird.f32 %v1134
      %vm1141 = vmor %vm1139, %vm1140
      %v1142 = vsel %vm1141, %v1134, %v1138
      %v1143 = vand.u32 2147483647, %v992
      %vm1144 = vcmp.eq.f32.partialorder %v1143, 8.507059e+37
      %v1145 = vand.u32 %v992, 2147483648
      %v1146 = vor.u32 1.1754944e-38, %v1145
      %v1147 = vsel %vm1144, %v1146, %v1142
      %v1148 = vmul.f32 1.0, %v1147
      %v1149 = vrcp.pop %v993
      %v1150 = vmul.f32 %v993, %v1149
      %v1151 = vsub.f32 1.0, %v1150
      %v1152 = vmul.f32 %v1149, %v1151
      %v1153 = vadd.f32 %v1149, %v1152
      %vm1154 = vweird.f32 %v993
      %vm1155 = vweird.f32 %v1149
      %vm1156 = vmor %vm1154, %vm1155
      %v1157 = vsel %vm1156, %v1149, %v1153
      %v1158 = vand.u32 2147483647, %v993
      %vm1159 = vcmp.eq.f32.partialorder %v1158, 8.507059e+37
      %v1160 = vand.u32 %v993, 2147483648
      %v1161 = vor.u32 1.1754944e-38, %v1160
      %v1162 = vsel %vm1159, %v1161, %v1157
      %v1163 = vmul.f32 1.0, %v1162
      %v1164 = vrcp.pop %v994
      %v1165 = vmul.f32 %v994, %v1164
      %v1166 = vsub.f32 1.0, %v1165
      %v1167 = vmul.f32 %v1164, %v1166
      %v1168 = vadd.f32 %v1164, %v1167
      %vm1169 = vweird.f32 %v994
      %vm1170 = vweird.f32 %v1164
      %vm1171 = vmor %vm1169, %vm1170
      %v1172 = vsel %vm1171, %v1164, %v1168
      %v1173 = vand.u32 2147483647, %v994
      %vm1174 = vcmp.eq.f32.partialorder %v1173, 8.507059e+37
      %v1175 = vand.u32 %v994, 2147483648
      %v1176 = vor.u32 1.1754944e-38, %v1175
      %v1177 = vsel %vm1174, %v1176, %v1172
      %v1178 = vmul.f32 1.0, %v1177
      %v1179 = vrcp.pop %v995
      %v1180 = vmul.f32 %v995, %v1179
      %v1181 = vsub.f32 1.0, %v1180
      %v1182 = vmul.f32 %v1179, %v1181
      %v1183 = vadd.f32 %v1179, %v1182
      %vm1184 = vweird.f32 %v995
      %vm1185 = vweird.f32 %v1179
      %vm1186 = vmor %vm1184, %vm1185
      %v1187 = vsel %vm1186, %v1179, %v1183
      %v1188 = vand.u32 2147483647, %v995
      %vm1189 = vcmp.eq.f32.partialorder %v1188, 8.507059e+37
      %v1190 = vand.u32 %v995, 2147483648
      %v1191 = vor.u32 1.1754944e-38, %v1190
      %v1192 = vsel %vm1189, %v1191, %v1187
      %v1193 = vmul.f32 1.0, %v1192
      %v1194 = vrcp.pop %v996
      %v1195 = vmul.f32 %v996, %v1194
      %v1196 = vsub.f32 1.0, %v1195
      %v1197 = vmul.f32 %v1194, %v1196
      %v1198 = vadd.f32 %v1194, %v1197
      %vm1199 = vweird.f32 %v996
      %vm1200 = vweird.f32 %v1194
      %vm1201 = vmor %vm1199, %vm1200
      %v1202 = vsel %vm1201, %v1194, %v1198
      %v1203 = vand.u32 2147483647, %v996
      %vm1204 = vcmp.eq.f32.partialorder %v1203, 8.507059e+37
      %v1205 = vand.u32 %v996, 2147483648
      %v1206 = vor.u32 1.1754944e-38, %v1205
      %v1207 = vsel %vm1204, %v1206, %v1202
      %v1208 = vmul.f32 1.0, %v1207
      %v1209 = vrcp.pop %v997
      %v1210 = vmul.f32 %v997, %v1209
      %v1211 = vsub.f32 1.0, %v1210
      %v1212 = vmul.f32 %v1209, %v1211
      %v1213 = vadd.f32 %v1209, %v1212
      %vm1214 = vweird.f32 %v997
      %vm1215 = vweird.f32 %v1209
      %vm1216 = vmor %vm1214, %vm1215
      %v1217 = vsel %vm1216, %v1209, %v1213
      %v1218 = vand.u32 2147483647, %v997
      %vm1219 = vcmp.eq.f32.partialorder %v1218, 8.507059e+37
      %v1220 = vand.u32 %v997, 2147483648
      %v1221 = vor.u32 1.1754944e-38, %v1220
      %v1222 = vsel %vm1219, %v1221, %v1217
      %v1223 = vmul.f32 1.0, %v1222
      %v1224 = vrcp.pop %v998
      %v1225 = vmul.f32 %v998, %v1224
      %v1226 = vsub.f32 1.0, %v1225
      %v1227 = vmul.f32 %v1224, %v1226
      %v1228 = vadd.f32 %v1224, %v1227
      %vm1229 = vweird.f32 %v998
      %vm1230 = vweird.f32 %v1224
      %vm1231 = vmor %vm1229, %vm1230
      %v1232 = vsel %vm1231, %v1224, %v1228
      %v1233 = vand.u32 2147483647, %v998
      %vm1234 = vcmp.eq.f32.partialorder %v1233, 8.507059e+37
      %v1235 = vand.u32 %v998, 2147483648
      %v1236 = vor.u32 1.1754944e-38, %v1235
      %v1237 = vsel %vm1234, %v1236, %v1232
      %v1238 = vmul.f32 1.0, %v1237
      %1240 = vset.pattern.permute.xlu0 0
      %1241 = vperm.xlu0 %1240, %v1013
      %v1242 = vpop.permute.xlu0 %1241
      %1245 = vset.pattern.permute.xlu0 0
      %1246 = vperm.xlu0 %1245, %v1028
      %v1247 = vpop.permute.xlu0 %1246
      %1250 = vset.pattern.permute.xlu0 0
      %1251 = vperm.xlu0 %1250, %v1043
      %v1252 = vpop.permute.xlu0 %1251
      %1255 = vset.pattern.permute.xlu0 0
      %1256 = vperm.xlu0 %1255, %v1058
      %v1257 = vpop.permute.xlu0 %1256
      %1260 = vset.pattern.permute.xlu0 0
      %1261 = vperm.xlu0 %1260, %v1073
      %v1262 = vpop.permute.xlu0 %1261
      %1265 = vset.pattern.permute.xlu0 0
      %1266 = vperm.xlu0 %1265, %v1088
      %v1267 = vpop.permute.xlu0 %1266
      %1270 = vset.pattern.permute.xlu0 0
      %1271 = vperm.xlu0 %1270, %v1103
      %v1272 = vpop.permute.xlu0 %1271
      %1275 = vset.pattern.permute.xlu0 0
      %1276 = vperm.xlu0 %1275, %v1118
      %v1277 = vpop.permute.xlu0 %1276
      %1280 = vset.pattern.permute.xlu0 0
      %1281 = vperm.xlu0 %1280, %v1133
      %v1282 = vpop.permute.xlu0 %1281
      %1285 = vset.pattern.permute.xlu0 0
      %1286 = vperm.xlu0 %1285, %v1148
      %v1287 = vpop.permute.xlu0 %1286
      %1290 = vset.pattern.permute.xlu0 0
      %1291 = vperm.xlu0 %1290, %v1163
      %v1292 = vpop.permute.xlu0 %1291
      %1295 = vset.pattern.permute.xlu0 0
      %1296 = vperm.xlu0 %1295, %v1178
      %v1297 = vpop.permute.xlu0 %1296
      %1300 = vset.pattern.permute.xlu0 0
      %1301 = vperm.xlu0 %1300, %v1193
      %v1302 = vpop.permute.xlu0 %1301
      %1305 = vset.pattern.permute.xlu0 0
      %1306 = vperm.xlu0 %1305, %v1208
      %v1307 = vpop.permute.xlu0 %1306
      %1310 = vset.pattern.permute.xlu0 0
      %1311 = vperm.xlu0 %1310, %v1223
      %v1312 = vpop.permute.xlu0 %1311
      %1315 = vset.pattern.permute.xlu0 0
      %1316 = vperm.xlu0 %1315, %v1238
      %v1317 = vpop.permute.xlu0 %1316
      %v1319 = vmul.f32 %v1242, %v808
      %v1320 = vmul.f32 %v1247, %v810
      %v1321 = vmul.f32 %v1252, %v813
      %v1322 = vmul.f32 %v1257, %v815
      %v1323 = vmul.f32 %v1262, %v818
      %v1324 = vmul.f32 %v1267, %v820
      %v1325 = vmul.f32 %v1272, %v823
      %v1326 = vmul.f32 %v1277, %v825
      %v1327 = vmul.f32 %v1282, %v828
      %v1328 = vmul.f32 %v1287, %v830
      %v1329 = vmul.f32 %v1292, %v833
      %v1330 = vmul.f32 %v1297, %v835
      %v1331 = vmul.f32 %v1302, %v838
      %v1332 = vmul.f32 %v1307, %v840
      %v1333 = vmul.f32 %v1312, %v843
      %v1334 = vmul.f32 %v1317, %v845
      %1335 = vst.msk [vmem:[%s282] sm:$0xff] %vm397, %v1319
      %1336 = vst.msk [vmem:[%s282 + $0x8] sm:$0xff] %vm397, %v1320
      %1337 = vst.msk [vmem:[%s282 + $0x10] sm:$0xff] %vm397, %v1321
      %1338 = vst.msk [vmem:[%s282 + $0x18] sm:$0xff] %vm397, %v1322
      %1339 = vst.msk [vmem:[%s282 + $0x20] sm:$0xff] %vm397, %v1323
      %1340 = vst.msk [vmem:[%s282 + $0x28] sm:$0xff] %vm397, %v1324
      %1341 = vst.msk [vmem:[%s282 + $0x30] sm:$0xff] %vm397, %v1325
      %1342 = vst.msk [vmem:[%s282 + $0x38] sm:$0xff] %vm397, %v1326
      %1343 = vst.msk [vmem:[%s282 + $0x40] sm:$0xff] %vm397, %v1327
      %1344 = vst.msk [vmem:[%s282 + $0x48] sm:$0xff] %vm397, %v1328
      %1345 = vst.msk [vmem:[%s282 + $0x50] sm:$0xff] %vm397, %v1329
      %1346 = vst.msk [vmem:[%s282 + $0x58] sm:$0xff] %vm397, %v1330
      %1347 = vst.msk [vmem:[%s282 + $0x60] sm:$0xff] %vm397, %v1331
      %1348 = vst.msk [vmem:[%s282 + $0x68] sm:$0xff] %vm397, %v1332
      %1349 = vst.msk [vmem:[%s282 + $0x70] sm:$0xff] %vm397, %v1333
      %1350 = vst.msk [vmem:[%s282 + $0x78] sm:$0xff] %vm397, %v1334
      %s1351 = smul.u32 16, %s20
      %p1352 = scmp.lt.s32.totalorder %s1351, 31
      %s1353 = scalar_select %p1352, %s1351, 31
      %s1354 = smul.addr %s1353, 8
      %s1355 = scalar_lea.vmem %s7, %s1354
      // Predicated region
      $region49: #{tpu_custom_call.1} parent=47 // pred_check
        %p1356 = pneg %p190
      $region50: #{tpu_custom_call.1} parent=47 // pred_check_branch
        %1358 = sbr.rel (%p1356) target = $region52
      $region51: #{tpu_custom_call.1} parent=47 // pred_region
        %s1359 = smul.u32 16, %s20
      $region52: #{tpu_custom_call.1} parent=47 // pred_fallthru
        _
    $region48: #{tpu_custom_call.1} parent=5 // pred_fallthru
      _
    %p1360 = scmp.le.s32.totalorder 2, %s15
    // Predicated region
    $region53: #{tpu_custom_call.1} parent=5 // pred_check
      %p1361 = pneg %p1360
    $region54: #{tpu_custom_call.1} parent=5 // pred_check_branch
      %1363 = sbr.rel (%p1361) target = $region56
    $region55: #{tpu_custom_call.1} parent=5 // pred_region
      %s1364 = ssub.s32 %s15, 2
      // Predicated region
      $region57: #{tpu_custom_call.1} parent=55 // pred_check
        %p1365 = pneg %p196
      $region58: #{tpu_custom_call.1} parent=55 // pred_check_branch
        %1367 = sbr.rel (%p1365) target = $region60
      $region59: #{tpu_custom_call.1} parent=55 // pred_region
        %s1368 = smul.u32 16, %s21
        %p1369 = scmp.lt.s32.totalorder %s1368, 31
        %s1370 = scalar_select %p1369, %s1368, 31
        %s1371 = smul.addr %s1370, 8
        %s1372 = scalar_lea.vmem %s7, %s1371
      $region60: #{tpu_custom_call.1} parent=55 // pred_fallthru
        _
    $region56: #{tpu_custom_call.1} parent=5 // pred_fallthru
      _
  $region6: #{tpu_custom_call.1} parent=0 // loop_footer
    %s19 = sadd.s32 1, %s15
  $region7: #{tpu_custom_call.1} parent=0 // loop_footer_branch
    %14 = sbr.rel target = $region3
  $region8: #{tpu_custom_call.1} parent=0 // loop_exit
    _

</llo_original>
